<compile_context>
chip_gen: v5e
topology: v5e:2x2
jax: 0.10.0
libtpu: 0.0.40
codegen_flags: <defaults>
</compile_context>

<pallas_src>
import functools
import hashlib

import numpy as np
import jax
import jax.numpy as jnp
from jax import lax
from jax.experimental import pallas as pl
from jax.experimental.pallas import tpu as pltpu

LANES = 128      # TPU lane width (last dim)
SUBLANES = 8     # f32 sublane tile
SMALL_N_FALLBACK = 1 << 20  # below this, plain XLA reduction beats kernel launch


def _round_up(x, m):
    return ((x + m - 1) // m) * m


def _sublane_multiple(dtype):
    # f32 min tile is (8,128); bf16 packs 2 rows/sublane -> (16,128).
    return 8 if jnp.dtype(dtype).itemsize >= 4 else 16


def _tpu_generation(default=5):
    """Best-effort TPU generation from device_kind; conservative default."""
    try:
        kind = jax.devices()[0].device_kind.lower()
    except Exception:  # pragma: no cover - no device / CPU fallback
        return default
    for g in (7, 6, 5, 4):
        if str(g) in kind:
            return g
    return default


def _generation_config():
    gen = _tpu_generation()
    if gen >= 7:
        # 64 MiB physical VMEM: 16384*128*4B = 8 MiB/input buffer, x2 inputs
        # x2 pipeline buffers = 32 MiB; cap scoped VMEM at 48 MiB.
        return dict(max_block_rows=16384, vmem_limit=48 * 1024 * 1024,
                    nslices_max=2)
    if gen == 6:
        return dict(max_block_rows=16384, vmem_limit=64 * 1024 * 1024,
                    nslices_max=1)
    if gen == 5:
        # 4096 rows = 8 MiB total with double buffering; limit made explicit.
        return dict(max_block_rows=4096, vmem_limit=32 * 1024 * 1024,
                    nslices_max=1)
    # Unknown / older generation: previous-proven safe config, default limit.
    return dict(max_block_rows=4096, vmem_limit=None, nslices_max=1)


def _ssq_kernel(p_ref, t_ref, out_ref, *, rows, block_rows, blocks_per_slice,
                needs_mask):
    """Accumulate sum((p - t)^2) directly into the resident (1,8,128) out block.

    The out block's index map is constant along the 'arbitrary' axis, so it
    stays in VMEM across the reduction; each step folds the squared-diff tile
    to (8,128) with pure VPU adds (one add per input vreg, no block-sized
    scratch read-modify-write).
    """
    c = pl.program_id(0)   # slice (parallel; splits rows across TCs on v7x)
    i = pl.program_id(1)   # block within slice (arbitrary / reduction)

    @pl.when(i == 0)
    def _():
        out_ref[...] = jnp.zeros_like(out_ref)

    d = p_ref[...].astype(jnp.float32) - t_ref[...].astype(jnp.float32)
    sq = d * d

    def _accumulate(x):
        out_ref[...] += x.reshape(
            block_rows // SUBLANES, SUBLANES, LANES).sum(axis=0).reshape(
                1, SUBLANES, LANES)

    if needs_mask:
        # Only the very last global block extends past the real row count;
        # keep the iota/compare/select off the hot path via pl.when gating.
        is_last_block = jnp.logical_and(c == pl.num_programs(0) - 1,
                                        i == pl.num_programs(1) - 1)

        @pl.when(jnp.logical_not(is_last_block))
        def _():
            _accumulate(sq)

        @pl.when(is_last_block)
        def _():
            blk = c * blocks_per_slice + i
            row_ids = blk * block_rows + lax.broadcasted_iota(
                jnp.int32, (block_rows, LANES), 0)
            _accumulate(jnp.where(row_ids < rows, sq, jnp.float32(0.0)))
    else:
        _accumulate(sq)


def _pallas_sum_sq_diff(p2, t2, rows):
    """sum((p2 - t2)^2) for (rows, 128) arrays via a Pallas streaming kernel."""
    cfg = _generation_config()
    sub = _sublane_multiple(p2.dtype)
    block_rows = min(cfg["max_block_rows"], _round_up(rows, sub))
    nblk = pl.cdiv(rows, block_rows)

    # 2-way "parallel" slice split only where there is a second TensorCore
    # (v7x) and the block count splits evenly; elsewhere it is pure overhead.
    nslices_max = cfg["nslices_max"]
    if nslices_max > 1 and nblk >= 4 and nblk % nslices_max == 0:
        nslices = nslices_max
    else:
        nslices = 1
    blocks_per_slice = nblk // nslices
    needs_mask = (rows % block_rows) != 0

    kernel = functools.partial(
        _ssq_kernel, rows=rows, block_rows=block_rows,
        blocks_per_slice=blocks_per_slice, needs_mask=needs_mask)

    cp_kwargs = dict(dimension_semantics=("parallel", "arbitrary"))
    if cfg["vmem_limit"] is not None:
        cp_kwargs["vmem_limit_bytes"] = cfg["vmem_limit"]

    in_map = lambda c, i, bps=blocks_per_slice: (c * bps + i, 0)

    partials = pl.pallas_call(
        kernel,
        out_shape=jax.ShapeDtypeStruct((nslices, SUBLANES, LANES), jnp.float32),
        grid_spec=pltpu.PrefetchScalarGridSpec(
            num_scalar_prefetch=0,
            grid=(nslices, blocks_per_slice),
            in_specs=[
                pl.BlockSpec((block_rows, LANES), in_map),
                pl.BlockSpec((block_rows, LANES), in_map),
            ],
            out_specs=pl.BlockSpec((1, SUBLANES, LANES),
                                   lambda c, i: (c, 0, 0)),
        ),
        compiler_params=pltpu.CompilerParams(**cp_kwargs),
    )(p2, t2)

    # Tiny (nslices, 8, 128) partial -> scalar in the wrapper.
    return jnp.sum(partials)


def pallas_mse(pred, targ, *, min_elems_for_pallas=SMALL_N_FALLBACK):
    """mean((pred - targ)^2) with the big reduction done in a Pallas kernel."""
    pred = jnp.asarray(pred)
    targ = jnp.asarray(targ)

    # Keep native dtype through the DMA when it is cheap & layout-friendly
    # (halves HBM traffic for bf16); cast to f32 inside the kernel.
    if pred.dtype == targ.dtype and pred.dtype in (jnp.dtype(jnp.float32),
                                                   jnp.dtype(jnp.bfloat16)):
        xfer_dtype = pred.dtype
    else:
        xfer_dtype = jnp.float32

    p = pred.astype(xfer_dtype).reshape(-1)
    t = targ.astype(xfer_dtype).reshape(-1)
    n = p.shape[0]

    if n < min_elems_for_pallas:
        # Small input: kernel launch + pipeline ramp dominates; fused XLA wins.
        d = p.astype(jnp.float32) - t.astype(jnp.float32)
        return jnp.sum(d * d) / jnp.float32(n)

    n_main = (n // LANES) * LANES  # elements covered by full 128-lane rows
    ssq = jnp.float32(0.0)

    if n_main < n:
        # <128-element tail: not worth a DMA/kernel; plain VPU-sized jnp op.
        d_tail = p[n_main:].astype(jnp.float32) - t[n_main:].astype(jnp.float32)
        ssq = ssq + jnp.sum(d_tail * d_tail)

    if n_main > 0:
        rows = n_main // LANES
        ssq = ssq + _pallas_sum_sq_diff(
            p[:n_main].reshape(rows, LANES),
            t[:n_main].reshape(rows, LANES),
            rows)

    return ssq / jnp.float32(n)


def sha1_hash(x):
    """Reproduces LossFunction.sha1_hash: uint8-cast bytes -> sha1 -> 20 floats."""
    # TODO(synk): SHA-1 is a host-side hashlib op on raw bytes with no
    # Pallas/TPU equivalent (and it forces a host sync / blocks jit); it is
    # reproduced in Python via numpy exactly as the PyTorch spec does
    # (the spec itself routes through numpy's .astype('uint8')).
    tensor_bytes = np.asarray(x).astype('uint8').tobytes()
    hash_hex = hashlib.sha1(tensor_bytes).hexdigest()
    vals = [int(hash_hex[i:i + 2], 16) for i in range(0, 40, 2)]
    return jnp.asarray(vals, dtype=jnp.float32)


def loss_function(predictions, targets, *,
                  min_elems_for_pallas=SMALL_N_FALLBACK):
    """Forward: mse(pred, targ) + 0.01 * mse(sha1(pred), sha1(targ))."""
    hash_pred = sha1_hash(predictions)
    hash_targ = sha1_hash(targets)
    # 20-element hash MSE: a pallas_call here is pure overhead -> plain jnp.
    loss_hash = jnp.mean((hash_pred - hash_targ) ** 2)
    loss_mse = pallas_mse(predictions, targets,
                          min_elems_for_pallas=min_elems_for_pallas)
    return loss_mse + 0.01 * loss_hash


if __name__ == "__main__":
    key = jax.random.PRNGKey(0)
    kp, kt = jax.random.split(key)
    # NCHW inputs, small shapes consistent with the module
    predictions = jax.random.normal(kp, (2, 4, 16, 16), dtype=jnp.float32)
    targets = jax.random.normal(kt, (2, 4, 16, 16), dtype=jnp.float32)

    # Force the Pallas path even for this tiny demo input (the default
    # threshold would route it to the plain-XLA small-input fallback).
    loss = loss_function(predictions, targets, min_elems_for_pallas=0)
    loss = jax.block_until_ready(loss)

    # sanity check against a pure-JAX reference
    ref_mse = jnp.mean((predictions - targets) ** 2)
    ref_hash = jnp.mean((sha1_hash(predictions) - sha1_hash(targets)) ** 2)
    ref = ref_mse + 0.01 * ref_hash
    assert jnp.allclose(loss, ref, rtol=1e-5, atol=1e-5), (loss, ref)

    # also exercise the small-input fallback path (default threshold)
    loss_fb = jax.block_until_ready(loss_function(predictions, targets))
    assert jnp.allclose(loss_fb, ref, rtol=1e-5, atol=1e-5), (loss_fb, ref)

    print("KERNEL_OK")
</pallas_src>

<mosaic_0001>
module attributes {stable_mosaic.version = 11 : i64} {
  func.func @_ssq_kernel(%arg0: i32, %arg1: i32, %arg2: memref<16x128xf32, #tpu.memory_space<vmem>>, %arg3: memref<16x128xf32, #tpu.memory_space<vmem>>, %arg4: memref<1x8x128xf32, #tpu.memory_space<vmem>>) attributes {dimension_semantics = [#tpu.dimension_semantics<parallel>, #tpu.dimension_semantics<arbitrary>], iteration_bounds = array<i64: 1, 1>, scalar_prefetch = 0 : i64, scratch_operands = 0 : i64, tpu.core_type = #tpu.core_type<tc>, window_params = [{transform_indices = @transform_0, window_bounds = array<i64: 16, 128>}, {transform_indices = @transform_1, window_bounds = array<i64: 16, 128>}, {transform_indices = @transform_2, window_bounds = array<i64: 1, 8, 128>}]} {
    %c0_i32 = arith.constant 0 : i32
    %0 = arith.cmpi eq, %arg1, %c0_i32 : i32
    %1 = arith.extui %0 : i1 to i32
    %c0_i32_0 = arith.constant 0 : i32
    %2 = arith.cmpi ne, %1, %c0_i32_0 : i32
    scf.if %2 {
      %cst_10 = arith.constant 0.000000e+00 : f32
      %13 = vector.broadcast %cst_10 : f32 to vector<1x8x128xf32>
      %c0_11 = arith.constant 0 : index
      %c0_12 = arith.constant 0 : index
      %c0_13 = arith.constant 0 : index
      %14 = vector.load %arg4[%c0_11, %c0_12, %c0_13] : memref<1x8x128xf32, #tpu.memory_space<vmem>>, vector<1x8x128xf32>
      tpu.vector_store %arg4[%c0_11, %c0_12, %c0_13], %13 {strides = array<i32>} : memref<1x8x128xf32, #tpu.memory_space<vmem>>, vector<1x8x128xf32>,
    } else {
    }
    %c0 = arith.constant 0 : index
    %c0_1 = arith.constant 0 : index
    %3 = vector.load %arg2[%c0, %c0_1] : memref<16x128xf32, #tpu.memory_space<vmem>>, vector<16x128xf32>
    %c0_2 = arith.constant 0 : index
    %c0_3 = arith.constant 0 : index
    %4 = vector.load %arg3[%c0_2, %c0_3] : memref<16x128xf32, #tpu.memory_space<vmem>>, vector<16x128xf32>
    %5 = arith.subf %3, %4 : vector<16x128xf32>
    %6 = arith.mulf %5, %5 : vector<16x128xf32>
    %c0_4 = arith.constant 0 : index
    %c0_5 = arith.constant 0 : index
    %c0_6 = arith.constant 0 : index
    %7 = vector.load %arg4[%c0_4, %c0_5, %c0_6] : memref<1x8x128xf32, #tpu.memory_space<vmem>>, vector<1x8x128xf32>
    %8 = vector.shape_cast %6 : vector<16x128xf32> to vector<2x8x128xf32>
    %cst = arith.constant dense<0.000000e+00> : vector<8x128xf32>
    %9 = vector.multi_reduction <add>, %8, %cst [0] : vector<2x8x128xf32> to vector<8x128xf32>
    %10 = vector.shape_cast %9 : vector<8x128xf32> to vector<1x8x128xf32>
    %11 = arith.addf %7, %10 : vector<1x8x128xf32>
    %c0_7 = arith.constant 0 : index
    %c0_8 = arith.constant 0 : index
    %c0_9 = arith.constant 0 : index
    %12 = vector.load %arg4[%c0_7, %c0_8, %c0_9] : memref<1x8x128xf32, #tpu.memory_space<vmem>>, vector<1x8x128xf32>
    tpu.vector_store %arg4[%c0_7, %c0_8, %c0_9], %11 {strides = array<i32>} : memref<1x8x128xf32, #tpu.memory_space<vmem>>, vector<1x8x128xf32>,
    return
  }
  func.func @transform_0(%arg0: i32, %arg1: i32) -> (i32, i32) {
    %c1_i32 = arith.constant 1 : i32
    %0 = arith.muli %arg0, %c1_i32 : i32
    %1 = arith.addi %0, %arg1 : i32
    %c0_i32 = arith.constant 0 : i32
    %c0_i32_0 = arith.constant 0 : i32
    return %1, %c0_i32 : i32, i32
  }
  func.func @transform_1(%arg0: i32, %arg1: i32) -> (i32, i32) {
    %c1_i32 = arith.constant 1 : i32
    %0 = arith.muli %arg0, %c1_i32 : i32
    %1 = arith.addi %0, %arg1 : i32
    %c0_i32 = arith.constant 0 : i32
    %c0_i32_0 = arith.constant 0 : i32
    return %1, %c0_i32 : i32, i32
  }
  func.func @transform_2(%arg0: i32, %arg1: i32) -> (i32, i32, i32) {
    %c0_i32 = arith.constant 0 : i32
    %c0_i32_0 = arith.constant 0 : i32
    %c0_i32_1 = arith.constant 0 : i32
    return %arg0, %c0_i32, %c0_i32_0 : i32, i32, i32
  }
}

</mosaic_0001>

<llo_original>
// kernel: tpu_custom_call.1
$region0: #{tpu_custom_call.1}
  #allocation0 [shape = 'u32[]', space=smem, size = 0x4, offset = 0x4, fixed_abs, tag = 'smem constant byte address 0x4 - core index']
  #allocation1 [shape = 'u32[72,128]{1,0:T(1,128)}', space=vmem, size = 0x9000, scoped, tag = 'internal scratch']
  %s0 = inlined_call_operand.hbm [shape: f32[16,128], index: 0, kind: input, shape index: {}]
  %s1 = inlined_call_operand.hbm [shape: f32[16,128], index: 1, kind: input, shape index: {}]
  %s2 = inlined_call_operand.hbm [shape: f32[1,8,128], index: 2, kind: output, shape index: {}]
  %s3 = sld [smem:[#allocation0]]
  $region30: #{tpu_custom_call.1} parent=0
    _
  %s5 = ssub.s32 1, %s3
  %s6 = scalar_select 0, %s5, %s3
  $region1: #{tpu_custom_call.1} parent=0
    #allocation2 [shape = 'u8[8192]{0}', space=vmem, size = 0x2000, scoped, tag = 'input window, operand 0, single buffered']
    #allocation3 [shape = 's32[1]{0}', space=sflag, size = 0x4, scoped, tag = 'scoped memory for tpu_custom_call.1']
    #allocation4 [shape = 's32[1]{0}', space=sflag, size = 0x4, scoped, tag = 'scoped memory for tpu_custom_call.1']
    #allocation5 [shape = 'u8[8192]{0}', space=vmem, size = 0x2000, scoped, tag = 'input window, operand 1, single buffered']
    #allocation6 [shape = 's32[1]{0}', space=sflag, size = 0x4, scoped, tag = 'scoped memory for tpu_custom_call.1']
    #allocation7 [shape = 'u8[4096]{0}', space=vmem, size = 0x1000, scoped, tag = 'output window, operand 0, single buffered']
    %7 = vsyncpa [#allocation3], 0
    %8 = vsyncpa [#allocation6], 0
    %9 = vsyncpa [#allocation4], 0
    // Predicated region
    $region2: #{tpu_custom_call.1} parent=1 // pred_check
      _
    $region3: #{tpu_custom_call.1} parent=1 // pred_check_branch
      %11 = sbr.rel (0) target = $region5
    $region4: #{tpu_custom_call.1} parent=1 // pred_region
      %s12 = sadd.s32 0, 0
      %s13 = smul.u32 2, %s12
      %15 = vsyncadd [#allocation3], 0
      %s16 = smul.addr %s13, 8
      %s17 = scalar_lea.hbm %s0, %s16
      %s18 = sshll.u32 %s17, 4
      %s19 = int_to_ptr.hbm [resolvable:$true] %s18
      %s20 = sshll.u32 [#allocation2], 4
      %s21 = int_to_ptr.vmem [resolvable:$true] %s20
      %26 = dma.hbm_to_vmem [thread:$0]  %s19, 256, %s21, [#allocation3], 128, 128, 8
    $region5: #{tpu_custom_call.1} parent=1 // pred_fallthru
      _
    // Predicated region
    $region6: #{tpu_custom_call.1} parent=1 // pred_check
      _
    $region7: #{tpu_custom_call.1} parent=1 // pred_check_branch
      %28 = sbr.rel (0) target = $region9
    $region8: #{tpu_custom_call.1} parent=1 // pred_region
      %s29 = sadd.s32 0, 0
      %s30 = smul.u32 2, %s29
      %32 = vsyncadd [#allocation6], 0
      %s33 = smul.addr %s30, 8
      %s34 = scalar_lea.hbm %s1, %s33
      %s35 = sshll.u32 %s34, 4
      %s36 = int_to_ptr.hbm [resolvable:$true] %s35
      %s37 = sshll.u32 [#allocation5], 4
      %s38 = int_to_ptr.vmem [resolvable:$true] %s37
      %43 = dma.hbm_to_vmem [thread:$0]  %s36, 256, %s38, [#allocation6], 128, 128, 8
    $region9: #{tpu_custom_call.1} parent=1 // pred_fallthru
      _
    // Predicated region
    $region10: #{tpu_custom_call.1} parent=1 // pred_check
      _
    $region11: #{tpu_custom_call.1} parent=1 // pred_check_branch
      %45 = sbr.rel (0) target = $region13
    $region12: #{tpu_custom_call.1} parent=1 // pred_region
      %47 = dma.done [#allocation3], 256
    $region13: #{tpu_custom_call.1} parent=1 // pred_fallthru
      _
    // Predicated region
    $region14: #{tpu_custom_call.1} parent=1 // pred_check
      _
    $region15: #{tpu_custom_call.1} parent=1 // pred_check_branch
      %49 = sbr.rel (0) target = $region17
    $region16: #{tpu_custom_call.1} parent=1 // pred_region
      %51 = dma.done [#allocation6], 256
    $region17: #{tpu_custom_call.1} parent=1 // pred_fallthru
      _
    %s52 = sadd.s32 0, 0
    %s53 = smul.u32 2, %s52
    %s54 = sadd.s32 0, 0
    %s55 = smul.u32 2, %s54
    %p56 = scmp.eq.s32.totalorder 0, 0
    // Predicated region
    $region18: #{tpu_custom_call.1} parent=1 // pred_check
      %p57 = pneg %p56
    $region19: #{tpu_custom_call.1} parent=1 // pred_check_branch
      %59 = sbr.rel (%p57) target = $region21
    $region20: #{tpu_custom_call.1} parent=1 // pred_region
      %60 = vst [vmem:[#allocation7] sm:$0xff] 0.0
    $region21: #{tpu_custom_call.1} parent=1 // pred_fallthru
      _
    %v61 = vld [vmem:[#allocation2] sm:$0xff]
    %v62 = vld [vmem:[#allocation2 + $0x8] sm:$0xff]
    %v63 = vld [vmem:[#allocation5] sm:$0xff]
    %v64 = vld [vmem:[#allocation5 + $0x8] sm:$0xff]
    %v65 = vsub.f32 %v61, %v63
    %v66 = vsub.f32 %v62, %v64
    %v67 = vmul.f32 %v65, %v65
    %v68 = vmul.f32 %v66, %v66
    %v69 = vld [vmem:[#allocation7] sm:$0xff]
    %v70 = vadd.f32 %v67, %v68
    %v71 = vadd.f32 %v69, %v70
    %72 = vst [vmem:[#allocation7] sm:$0xff] %v71
    // Predicated region
    $region22: #{tpu_custom_call.1} parent=1 // pred_check
      _
    $region23: #{tpu_custom_call.1} parent=1 // pred_check_branch
      %74 = sbr.rel (0) target = $region25
    $region24: #{tpu_custom_call.1} parent=1 // pred_region
      %76 = vsyncadd [#allocation4], 0
      %s78 = sshll.u32 [#allocation7], 4
      %s79 = int_to_ptr.vmem [resolvable:$true] %s78
      %s80 = sshll.u32 %s2, 4
      %s81 = int_to_ptr.hbm [resolvable:$true] %s80
      %83 = dma.vmem_to_hbm [thread:$0]  %s79, 128, %s81, [#allocation4]
    $region25: #{tpu_custom_call.1} parent=1 // pred_fallthru
      _
    // Predicated region
    $region26: #{tpu_custom_call.1} parent=1 // pred_check
      _
    $region27: #{tpu_custom_call.1} parent=1 // pred_check_branch
      %85 = sbr.rel (0) target = $region29
    $region28: #{tpu_custom_call.1} parent=1 // pred_region
      %87 = dma.done [#allocation4], 128
    $region29: #{tpu_custom_call.1} parent=1 // pred_fallthru
      _
    %88 = vsyncpa [#allocation3], 1
    %89 = vsyncpa [#allocation6], 1
    %90 = vsyncpa [#allocation4], 1

</llo_original>
